<compile_context>
chip_gen: v7x
topology: tpu7x:2x2x1
jax: 0.10.0
libtpu: 0.0.40
codegen_flags: <defaults>
</compile_context>

<pallas_src>
import jax
import jax.numpy as jnp
from jax.experimental import pallas as pl
from jax.experimental.pallas import tpu as pltpu


def cross_attn_bcast_kernel(kv_ref, o_ref):
    # kv_ref: (TB, D)      -- a tile of key/value rows (sublane-aligned batch tile)
    # o_ref:  (TB, S * D)  -- flattened (S, D) output per row, lane-dense last dim
    kv = kv_ref[...]                         # stay in native I/O dtype (no upcast)
    s = o_ref.shape[-1] // kv.shape[-1]      # static number of query positions

    # softmax over the size-1 key axis is exactly 1.0, so each output row is
    # the key/value row tiled S times along the lane axis
    # (equivalent to jnp.tile(kv, (1, s)); built with a lane-dim concat which
    # lowers to cheap lane shifts, no MXU/EUP/XLU work).
    row = jnp.concatenate([kv] * s, axis=-1)  # (TB, S*D)
    o_ref[...] = row.astype(o_ref.dtype)


def cross_attention(query, key_value, *, batch_tile=8):
    """query: (S, D), key_value: (B, D) -> (B, S, D), matching the PyTorch module."""
    S, D = query.shape
    B, D2 = key_value.shape
    assert D == D2, f"feature dims must match: {D} vs {D2}"

    # PyTorch result dtype follows promotion of query and key_value.
    out_dtype = jnp.result_type(query.dtype, key_value.dtype)

    # Block the batch axis: TB rows per grid step (8 aligns with the sublane
    # dim) instead of one row per ~0.35us grid step.
    tb = min(batch_tile, B)
    grid = (pl.cdiv(B, tb),)

    out_flat = pl.pallas_call(
        cross_attn_bcast_kernel,
        out_shape=jax.ShapeDtypeStruct((B, S * D), out_dtype),
        grid=grid,
        in_specs=[
            # key_value consumed directly as 2-D (no (B,1,D) reshape). The
            # query is never read inside the kernel -- the math does not
            # depend on it -- which saves its DMA entirely.
            pl.BlockSpec((tb, D), lambda b: (b, 0)),
        ],
        # Output presented as a lane-dense (TB, S*D) slab so stores are
        # unmasked vst instead of masked 32-lane partial stores.
        out_specs=pl.BlockSpec((tb, S * D), lambda b: (b, 0)),
        compiler_params=pltpu.CompilerParams(
            dimension_semantics=("parallel",),  # batch-tile axis; shards across TCs on v7x
        ),
    )(key_value)

    # Cheap wrapper-side reshape back to (B, S, D); kernel-side layout was kept
    # flat purely so the stores stay lane-dense.
    return out_flat.reshape(B, S, D)


def cross_attention_ref(query, key_value):
    """Pure-JAX reference mirroring the PyTorch module exactly."""
    B = key_value.shape[0]
    q = jnp.broadcast_to(query[None, :, :], (B,) + query.shape)      # (B, S, D)
    k = key_value[:, None, :]                                        # (B, 1, D)
    v = key_value[:, None, :]                                        # (B, 1, D)
    d_k = k.shape[-1]
    scores = jnp.matmul(q, jnp.swapaxes(k, -2, -1)) / (d_k ** 0.5)   # (B, S, 1)
    attn = jax.nn.softmax(scores, axis=-1)
    return jnp.matmul(attn, v)                                       # (B, S, D)


if __name__ == "__main__":
    key = jax.random.PRNGKey(0)
    k1, k2 = jax.random.split(key)

    S, D, B = 8, 32, 2                      # small shapes consistent with forward()
    query = jax.random.normal(k1, (S, D), dtype=jnp.float32)
    key_value = jax.random.normal(k2, (B, D), dtype=jnp.float32)

    out = cross_attention(query, key_value)
    out = jax.block_until_ready(out)

    ref = cross_attention_ref(query, key_value)
    assert out.shape == (B, S, D)
    assert jnp.allclose(out, ref, atol=1e-6, rtol=1e-6)

    print("KERNEL_OK")
</pallas_src>

<mosaic_0001>
module attributes {stable_mosaic.version = 11 : i64} {
  func.func @cross_attn_bcast_kernel(%arg0: i32, %arg1: memref<2x32xf32, #tpu.memory_space<vmem>>, %arg2: memref<2x256xf32, #tpu.memory_space<vmem>>) attributes {dimension_semantics = [#tpu.dimension_semantics<parallel>], iteration_bounds = array<i64: 1>, scalar_prefetch = 0 : i64, scratch_operands = 0 : i64, tpu.core_type = #tpu.core_type<tc>, window_params = [{transform_indices = @transform_0, window_bounds = array<i64: 2, 32>}, {transform_indices = @transform_1, window_bounds = array<i64: 2, 256>}]} {
    %c0 = arith.constant 0 : index
    %c0_0 = arith.constant 0 : index
    %0 = vector.load %arg1[%c0, %c0_0] : memref<2x32xf32, #tpu.memory_space<vmem>>, vector<2x32xf32>
    %1 = tpu.concatenate %0, %0, %0, %0, %0, %0, %0, %0 in 1 : vector<2x32xf32>, vector<2x32xf32>, vector<2x32xf32>, vector<2x32xf32>, vector<2x32xf32>, vector<2x32xf32>, vector<2x32xf32>, vector<2x32xf32> -> vector<2x256xf32>
    %c0_1 = arith.constant 0 : index
    %c0_2 = arith.constant 0 : index
    %2 = vector.load %arg2[%c0_1, %c0_2] : memref<2x256xf32, #tpu.memory_space<vmem>>, vector<2x256xf32>
    tpu.vector_store %arg2[%c0_1, %c0_2], %1 {strides = array<i32>} : memref<2x256xf32, #tpu.memory_space<vmem>>, vector<2x256xf32>,
    return
  }
  func.func @transform_0(%arg0: i32) -> (i32, i32) {
    %c0_i32 = arith.constant 0 : i32
    %c0_i32_0 = arith.constant 0 : i32
    return %arg0, %c0_i32 : i32, i32
  }
  func.func @transform_1(%arg0: i32) -> (i32, i32) {
    %c0_i32 = arith.constant 0 : i32
    %c0_i32_0 = arith.constant 0 : i32
    return %arg0, %c0_i32 : i32, i32
  }
}

</mosaic_0001>

<llo_original>
// kernel: tpu_custom_call.1
$region0: #{tpu_custom_call.1}
  #allocation0 [shape = 'u32[]', space=smem, size = 0x4, offset = 0x4, fixed_abs, tag = 'smem constant byte address 0x4 - core index']
  #allocation1 [shape = 'u32[144,128]{1,0:T(1,128)}', space=vmem, size = 0x12000, scoped, tag = 'internal scratch']
  %s0 = inlined_call_operand.hbm [shape: f32[2,32], index: 0, kind: input, shape index: {}]
  %s1 = inlined_call_operand.hbm [shape: f32[2,256], index: 1, kind: output, shape index: {}]
  %s2 = sld [smem:[#allocation0]]
  $region18: #{tpu_custom_call.1} parent=0
    _
  %s4 = ssub.s32 1, %s2
  %s5 = scalar_select 0, %s4, %s2
  $region1: #{tpu_custom_call.1} parent=0
    #allocation2 [shape = 'u8[1024]{0}', space=vmem, size = 0x400, scoped, tag = 'input window, operand 0, single buffered']
    #allocation3 [shape = 's32[1]{0}', space=sflag, size = 0x4, scoped, tag = 'scoped memory for tpu_custom_call.1']
    #allocation4 [shape = 's32[1]{0}', space=sflag, size = 0x4, scoped, tag = 'scoped memory for tpu_custom_call.1']
    #allocation5 [shape = 'u8[2048]{0}', space=vmem, size = 0x800, scoped, tag = 'output window, operand 0, single buffered']
    %6 = vsyncpa [#allocation3], 0
    %7 = vsyncpa [#allocation4], 0
    // Predicated region
    $region2: #{tpu_custom_call.1} parent=1 // pred_check
      _
    $region3: #{tpu_custom_call.1} parent=1 // pred_check_branch
      %9 = sbr.rel (0) target = $region5
    $region4: #{tpu_custom_call.1} parent=1 // pred_region
      %s11 = ssub.s32 32, 32
      %12 = vsyncadd [#allocation3], %s11
      %s14 = sshll.u32 [#allocation2], 4
      %s15 = int_to_ptr.vmem [resolvable:$true] %s14
      %17 = dma.hbm_to_vmem [thread:$0]  %s0, 32, %s15, [#allocation3]
    $region5: #{tpu_custom_call.1} parent=1 // pred_fallthru
      _
    // Predicated region
    $region6: #{tpu_custom_call.1} parent=1 // pred_check
      _
    $region7: #{tpu_custom_call.1} parent=1 // pred_check_branch
      %19 = sbr.rel (0) target = $region9
    $region8: #{tpu_custom_call.1} parent=1 // pred_region
      %20 = dma.done [#allocation3], 32
    $region9: #{tpu_custom_call.1} parent=1 // pred_fallthru
      _
    %v21 = vld [vmem:[#allocation2] sm:$0x3]
    %23 = vrot.lane.b32.xlu0 %v21, 32
    %v24 = vpop.permute.xlu0 %23
    %26 = vrot.lane.b32.xlu0 %v21, 64
    %v27 = vpop.permute.xlu0 %26
    %29 = vrot.lane.b32.xlu0 %v21, 96
    %v30 = vpop.permute.xlu0 %29
    %vm32 = vcmask 261120
    %v33 = vsel %vm32, %v21, %v24
    %vm34 = vcmask 523264
    %v35 = vsel %vm34, %v33, %v27
    %vm36 = vcmask 785408
    %v37 = vsel %vm36, %v35, %v30
    %v39 = vcombine.low %v37, %v37
    %v41 = vunpack.c.l.s4 1983009808
    %v42 = vunpack.c.0.s8 %v41
    %v43 = vlaneseq
    %v44 = vshrl.u32 %v43, 7
    %v45 = vsub.s32 %v42, %v44
    %v46 = vrot.slane %v39, %v45
    %48 = vst [vmem:[#allocation5] sm:$0xf] %v46
    // Predicated region
    $region10: #{tpu_custom_call.1} parent=1 // pred_check
      _
    $region11: #{tpu_custom_call.1} parent=1 // pred_check_branch
      %50 = sbr.rel (0) target = $region13
    $region12: #{tpu_custom_call.1} parent=1 // pred_region
      %s52 = ssub.s32 64, 64
      %53 = vsyncadd [#allocation4], %s52
      %s55 = sshll.u32 [#allocation5], 4
      %s56 = int_to_ptr.vmem [resolvable:$true] %s55
      %58 = dma.vmem_to_hbm [thread:$0]  %s56, 64, %s1, [#allocation4]
    $region13: #{tpu_custom_call.1} parent=1 // pred_fallthru
      _
    // Predicated region
    $region14: #{tpu_custom_call.1} parent=1 // pred_check
      _
    $region15: #{tpu_custom_call.1} parent=1 // pred_check_branch
      %60 = sbr.rel (0) target = $region17
    $region16: #{tpu_custom_call.1} parent=1 // pred_region
      %61 = dma.done [#allocation4], 64
    $region17: #{tpu_custom_call.1} parent=1 // pred_fallthru
      _
    %62 = vsyncpa [#allocation3], 1
    %63 = vsyncpa [#allocation4], 1

</llo_original>
